<compile_context>
chip_gen: v6e
topology: v6e:2x2x1
jax: 0.10.0
libtpu: 0.0.40
codegen_flags: <defaults>
</compile_context>

<pallas_src>
import functools
from math import comb

import jax
import jax.numpy as jnp
from jax.experimental import pallas as pl
from jax.experimental.pallas import tpu as pltpu

_LANE_CAP = 128 * 1024          # paranoid upper bound on lanes/tile (>> the 8K-32K sweet spot)
_VMEM_WORK_FRACTION = 0.42      # target working set as a fraction of per-generation VMEM
_VMEM_LIMIT_FRACTION = 0.75     # scoped-vmem limit handed to Mosaic


def _round_up(x: int, m: int) -> int:
    return ((x + m - 1) // m) * m


def _cdiv(a: int, b: int) -> int:
    return -(-a // b)


def _vmem_capacity_bytes() -> int:
    """Per-generation VMEM capacity (128 MiB v5e/v6e, 64 MiB v7x)."""
    try:
        return int(pltpu.get_tpu_info().vmem_capacity_bytes)
    except Exception:
        return 64 * 1024 * 1024          # conservative fallback (v7x-sized)


def _feature_axis_semantics():
    """CORE_PARALLEL actually shards grid steps across v7x's two TensorCores;
    plain PARALLEL is the safe/equivalent choice on single-TC v5e/v6e."""
    try:
        kind = jax.devices()[0].device_kind
    except Exception:
        kind = ""
    if "7" in kind:                      # e.g. "TPU7x"
        return pltpu.CORE_PARALLEL
    return pltpu.PARALLEL


def _abs_pow(x, p):
    """|x|**p specialised for small integer p (VPU-friendly)."""
    if isinstance(p, int):
        if p == 2:
            return x * x                 # drop the abs entirely
        if p == 1:
            return jnp.abs(x)
        if p % 2 == 0:
            return x ** p                # even power: sign irrelevant
        return jnp.abs(x) ** p
    return jnp.abs(x) ** p               # non-integer p fallback


# --------------------------------------------------------------------------
# Kernels
# --------------------------------------------------------------------------
def _cmd_kernel_single(a_ref, b_ref, o_ref, *, K: int, p, inv_n: float):
    """Whole batch resident: one grid step per feature tile (common small-N case).
    Uses exact centered moments (no recombination error)."""
    a = a_ref[...].astype(jnp.float32)           # (N, TILE_D)
    b = b_ref[...].astype(jnp.float32)
    inv = jnp.float32(inv_n)

    if K == 1:
        # Fast path: a single column reduction of (a - b).
        d1 = jnp.sum(a - b, axis=0, keepdims=True) * inv
        o_ref[0, 0] = jnp.sum(_abs_pow(d1, p))
    else:
        mean_a = jnp.sum(a, axis=0, keepdims=True) * inv
        mean_b = jnp.sum(b, axis=0, keepdims=True) * inv
        o_ref[0, 0] = jnp.sum(_abs_pow(mean_a - mean_b, p))
        # NOTE: the PyTorch module uses pow(self.K) (not pow(i)) inside its
        # i = 2..K loop, so the central moment is identical per iteration.
        cm_a = jnp.sum((a - mean_a) ** K, axis=0, keepdims=True) * inv
        cm_b = jnp.sum((b - mean_b) ** K, axis=0, keepdims=True) * inv
        o_ref[0, 1] = jnp.sum(_abs_pow(cm_a - cm_b, p))


def _raw_to_central(m, offset: int, K: int):
    """Central K-th moment from raw moments E[x^j] (rows offset..offset+K-1 of m)
    via the binomial expansion  E[(x-mu)^K] = sum_j C(K,j) E[x^j] (-mu)^(K-j)."""
    mu = m[offset:offset + 1, :]
    neg_mu = -mu
    cm = neg_mu ** K                              # j = 0 term (E[x^0] = 1)
    for j in range(1, K + 1):
        term = m[offset + j - 1:offset + j, :] * float(comb(K, j))
        if j < K:
            term = term * (neg_mu ** (K - j))
        cm = cm + term
    return cm


def _cmd_kernel_tiled(a_ref, b_ref, o_ref, mom_ref, *, K: int, p, inv_n: float):
    """Batch-tiled path: grid = (feature tiles, batch tiles).  Accumulates raw
    power sums per column in VMEM scratch across the inner batch axis and
    finalizes (binomial recombination + |.|^p lane reduce) at the last step."""
    j = pl.program_id(1)

    a = a_ref[...].astype(jnp.float32)            # (TILE_N, TILE_D)
    b = b_ref[...].astype(jnp.float32)

    if K == 1:
        upd = jnp.sum(a - b, axis=0, keepdims=True)               # (1, TILE_D)
    else:
        rows_a, rows_b = [], []
        pa, pb = a, b
        for k in range(1, K + 1):
            rows_a.append(jnp.sum(pa, axis=0, keepdims=True))     # sum x^k
            rows_b.append(jnp.sum(pb, axis=0, keepdims=True))
            if k < K:
                pa = pa * a
                pb = pb * b
        upd = jnp.concatenate(rows_a + rows_b, axis=0)            # (2K, TILE_D)

    @pl.when(j == 0)
    def _():
        mom_ref[...] = jnp.zeros_like(mom_ref)

    mom_ref[...] += upd

    @pl.when(j == pl.num_programs(1) - 1)
    def _():
        m = mom_ref[...] * jnp.float32(inv_n)     # raw moments E[x^k] per column
        if K == 1:
            o_ref[0, 0] = jnp.sum(_abs_pow(m, p))                 # m = meanA - meanB
        else:
            o_ref[0, 0] = jnp.sum(_abs_pow(m[0:1, :] - m[K:K + 1, :], p))
            cm_a = _raw_to_central(m, 0, K)
            cm_b = _raw_to_central(m, K, K)
            o_ref[0, 1] = jnp.sum(_abs_pow(cm_a - cm_b, p))


# --------------------------------------------------------------------------
# Tile selection
# --------------------------------------------------------------------------
def _choose_tiles(n, d, in_itemsize, K, *, tile_n_max=None, tile_d_max=None,
                  input_buffers=2):
    vmem_cap = _vmem_capacity_bytes()
    budget = int(_VMEM_WORK_FRACTION * vmem_cap)
    d_pad128 = _round_up(max(d, 1), 128)
    n_mom = 1 if K == 1 else 2 * K
    mom_sublanes = _round_up(n_mom, 8)
    f32_copies = 3 if K == 1 else 4      # live f32 upcast temporaries inside the kernel

    def budget_tile_d(tn):
        per_lane = (2 * input_buffers * tn * in_itemsize   # a & b pipelined input blocks
                    + f32_copies * tn * 4                  # in-kernel f32 temporaries
                    + mom_sublanes * 4)                    # raw-moment scratch
        return (budget // per_lane) // 128 * 128

    # --- batch tile: keep the whole batch resident when it fits; otherwise
    #     shrink until the budget allows a lane-dense feature tile. ---
    tile_n = n if tile_n_max is None else min(n, max(8, int(tile_n_max)))
    lane_target = min(d_pad128, _LANE_CAP, 512)
    while tile_n > 8 and budget_tile_d(tile_n) < lane_target:
        tile_n = max(8, _round_up(_cdiv(tile_n, 2), 8))

    if tile_n < n:
        num_n = _cdiv(n, tile_n)
        tile_n = _round_up(_cdiv(n, num_n), 8)   # rebalance; padding waste < 8*num_n rows
        num_n = _cdiv(n, tile_n)
    else:
        tile_n, num_n = n, 1

    # --- feature tile: as large as the budget allows (no arbitrary lane cap). ---
    td = max(128, budget_tile_d(tile_n))
    td = min(td, d_pad128, _LANE_CAP)
    if tile_d_max is not None:
        assert tile_d_max % 128 == 0
        td = min(td, int(tile_d_max))
    num_d = _cdiv(d_pad128, td)
    td = _round_up(_cdiv(d_pad128, num_d), 128)  # rebalance; padding waste < 128*num_d cols
    num_d = _cdiv(d_pad128, td)

    return tile_n, num_n, td, num_d, vmem_cap


# --------------------------------------------------------------------------
# Public entry point
# --------------------------------------------------------------------------
def cmd_loss(input_a, input_b, *, K: int = 1, p=2, decay: float = 1.0,
             tile_d: int | None = None, tile_n: int | None = None,
             input_buffers: int = 2, cast_to_bf16: bool = False):
    assert K > 0 and p > 0 and decay > 0
    assert input_a.shape == input_b.shape
    assert input_a.ndim >= 2

    n = input_a.shape[0]
    a2 = input_a.reshape(n, -1)                  # [N, D]
    b2 = input_b.reshape(n, -1)
    d = a2.shape[1]

    # Optional bandwidth/accuracy trade-off: this loss is HBM-bound, so halving
    # the bytes moved is the only ~2x-class lever; accumulation stays f32.
    if cast_to_bf16 and a2.dtype == jnp.float32:
        a2 = a2.astype(jnp.bfloat16)
        b2 = b2.astype(jnp.bfloat16)
    itemsize = jnp.dtype(a2.dtype).itemsize

    tn, num_n, td, num_d, vmem_cap = _choose_tiles(
        n, d, itemsize, K, tile_n_max=tile_n, tile_d_max=tile_d,
        input_buffers=input_buffers)

    # Zero-padding is exact: padded rows/columns contribute 0 to every raw
    # power sum, and 1/N uses the true batch size.
    n_pad = num_n * tn
    d_pad = num_d * td
    if (n_pad, d_pad) != (n, d):
        a2 = jnp.pad(a2, ((0, n_pad - n), (0, d_pad - d)))
        b2 = jnp.pad(b2, ((0, n_pad - n), (0, d_pad - d)))

    n_out = 1 if K == 1 else 2                   # skip dead store when K == 1
    inv_n = 1.0 / float(n)

    flops_per_elem = 2 if K == 1 else 2 * (2 * K - 1)
    cost = pl.CostEstimate(
        flops=int(flops_per_elem * n_pad * d_pad),
        transcendentals=0,
        bytes_accessed=int(2 * n_pad * d_pad * itemsize + num_d * n_out * 4))

    vmem_limit = int(_VMEM_LIMIT_FRACTION * vmem_cap)

    def in_spec(index_map):
        if input_buffers == 2:
            return pl.BlockSpec((tn, td), index_map)
        return pl.BlockSpec((tn, td), index_map,
                            pipeline_mode=pl.Buffered(input_buffers))

    if num_n == 1:
        kernel = functools.partial(_cmd_kernel_single, K=K, p=p, inv_n=inv_n)
        grid = (num_d,)
        in_specs = [in_spec(lambda i: (0, i)), in_spec(lambda i: (0, i))]
        out_specs = pl.BlockSpec((1, n_out), lambda i: (i, 0),
                                 memory_space=pltpu.MemorySpace.SMEM)
        scratch_shapes = ()
        inner_sem = ()
    else:
        kernel = functools.partial(_cmd_kernel_tiled, K=K, p=p, inv_n=inv_n)
        grid = (num_d, num_n)                    # batch (reduction) axis innermost
        in_specs = [in_spec(lambda i, j: (j, i)), in_spec(lambda i, j: (j, i))]
        out_specs = pl.BlockSpec((1, n_out), lambda i, j: (i, 0),
                                 memory_space=pltpu.MemorySpace.SMEM)
        n_mom = 1 if K == 1 else 2 * K
        scratch_shapes = (pltpu.VMEM((n_mom, td), jnp.float32),)
        inner_sem = (pltpu.ARBITRARY,)

    def run(d_sem):
        return pl.pallas_call(
            kernel,
            out_shape=jax.ShapeDtypeStruct((num_d, n_out), jnp.float32),
            grid=grid,
            in_specs=in_specs,
            out_specs=out_specs,
            scratch_shapes=scratch_shapes,
            compiler_params=pltpu.CompilerParams(
                dimension_semantics=(d_sem,) + inner_sem,
                vmem_limit_bytes=vmem_limit),
            cost_estimate=cost,
        )(a2, b2)

    d_sem = _feature_axis_semantics()
    if d_sem is pltpu.PARALLEL:
        partial_sums = run(pltpu.PARALLEL)
    else:
        try:
            partial_sums = run(d_sem)            # CORE_PARALLEL on v7x
        except Exception:
            partial_sums = run(pltpu.PARALLEL)   # conservative fallback

    sums = jnp.sum(partial_sums, axis=0)         # tiny cross-tile reduction
    inv_p = 1.0 / float(p)
    loss = sums[0] ** inv_p                      # ||meanA - meanB||_p
    if K > 1:
        # NOTE: faithfully reproduces the PyTorch code, which uses pow(self.K)
        # inside the i = 2..K loop, so loss_k is the same value each iteration.
        loss_k = sums[1] ** inv_p
        for i in range(2, K + 1):
            loss = loss + loss_k * (decay ** (i - 1))
    return loss


# --------------------------------------------------------------------------
# Reference & self-test
# --------------------------------------------------------------------------
def _reference_cmd_loss(a, b, *, K, p, decay):
    """Plain-JAX reference mirroring the PyTorch forward exactly."""
    n = a.shape[0]
    a = a.reshape(n, -1).astype(jnp.float32)
    b = b.reshape(n, -1).astype(jnp.float32)
    mean_a = jnp.mean(a, axis=0, keepdims=True)
    mean_b = jnp.mean(b, axis=0, keepdims=True)
    loss = jnp.sum(jnp.abs(mean_a - mean_b) ** p) ** (1.0 / p)
    if K > 1:
        dist_a = a - mean_a
        dist_b = b - mean_b
        for i in range(2, K + 1):
            cm_a = jnp.mean(dist_a ** K, axis=0)
            cm_b = jnp.mean(dist_b ** K, axis=0)
            loss_k = jnp.sum(jnp.abs(cm_a - cm_b) ** p) ** (1.0 / p)
            loss = loss + loss_k * (decay ** (i - 1))
    return loss


if __name__ == "__main__":
    key = jax.random.PRNGKey(0)
    ka, kb, kc, kd = jax.random.split(key, 4)

    # 1) Default config (K=1, p=2), small [N, D] input (D=200 exercises column padding).
    N, D = 8, 200
    a = jax.random.normal(ka, (N, D), dtype=jnp.float32)
    b = 0.5 * jax.random.normal(kb, (N, D), dtype=jnp.float32) + 0.1
    out = cmd_loss(a, b, K=1, p=2, decay=1.0)
    jax.block_until_ready(out)
    ref = _reference_cmd_loss(a, b, K=1, p=2, decay=1.0)
    assert jnp.allclose(out, ref, rtol=1e-5, atol=1e-5), (out, ref)

    # 2) Higher moments, forced multi-feature-tile grid, single batch tile.
    out = cmd_loss(a, b, K=3, p=2, decay=0.5, tile_d=128)
    jax.block_until_ready(out)
    ref = _reference_cmd_loss(a, b, K=3, p=2, decay=0.5)
    assert jnp.allclose(out, ref, rtol=1e-5, atol=1e-5), (out, ref)

    # 3) Batch-tiled raw-moment path on a 4-D feature map (N=20 pads to 24 rows).
    x = jax.random.normal(kc, (20, 4, 8, 8), dtype=jnp.float32)
    y = 0.7 * jax.random.normal(kd, (20, 4, 8, 8), dtype=jnp.float32) - 0.05
    out = cmd_loss(x, y, K=3, p=2, decay=0.5, tile_d=128, tile_n=8)
    jax.block_until_ready(out)
    ref = _reference_cmd_loss(x, y, K=3, p=2, decay=0.5)
    assert jnp.allclose(out, ref, rtol=1e-4, atol=1e-5), (out, ref)

    # 4) Batch-tiled K=1 fast path.
    out = cmd_loss(x, y, K=1, p=2, decay=1.0, tile_n=8)
    jax.block_until_ready(out)
    ref = _reference_cmd_loss(x, y, K=1, p=2, decay=1.0)
    assert jnp.allclose(out, ref, rtol=1e-5, atol=1e-5), (out, ref)

    # 5) bf16 inputs stay narrow in HBM; per-tile f32 accumulation inside the kernel.
    a16, b16 = a.astype(jnp.bfloat16), b.astype(jnp.bfloat16)
    out = cmd_loss(a16, b16, K=2, p=2, decay=1.0, tile_d=128)
    jax.block_until_ready(out)
    ref = _reference_cmd_loss(a16, b16, K=2, p=2, decay=1.0)
    assert jnp.allclose(out, ref, rtol=1e-3, atol=1e-3), (out, ref)

    print("KERNEL_OK")
</pallas_src>

<mosaic_0001>
module attributes {stable_mosaic.version = 11 : i64} {
  func.func @_cmd_kernel_single(%arg0: i32, %arg1: memref<8x256xf32, #tpu.memory_space<vmem>>, %arg2: memref<8x256xf32, #tpu.memory_space<vmem>>, %arg3: memref<1x1xf32, #tpu.memory_space<smem>>) attributes {dimension_semantics = [#tpu.dimension_semantics<parallel>], iteration_bounds = array<i64: 1>, scalar_prefetch = 0 : i64, scratch_operands = 0 : i64, tpu.core_type = #tpu.core_type<tc>, window_params = [{transform_indices = @transform_0, window_bounds = array<i64: 8, 256>}, {transform_indices = @transform_1, window_bounds = array<i64: 8, 256>}, {transform_indices = @transform_2, window_bounds = array<i64: 1, 1>}]} {
    %c0 = arith.constant 0 : index
    %c0_0 = arith.constant 0 : index
    %0 = vector.load %arg1[%c0, %c0_0] : memref<8x256xf32, #tpu.memory_space<vmem>>, vector<8x256xf32>
    %c0_1 = arith.constant 0 : index
    %c0_2 = arith.constant 0 : index
    %1 = vector.load %arg2[%c0_1, %c0_2] : memref<8x256xf32, #tpu.memory_space<vmem>>, vector<8x256xf32>
    %2 = arith.subf %0, %1 : vector<8x256xf32>
    %cst = arith.constant dense<0.000000e+00> : vector<256xf32>
    %3 = vector.multi_reduction <add>, %2, %cst [0] : vector<8x256xf32> to vector<256xf32>
    %4 = vector.shape_cast %3 : vector<256xf32> to vector<1x256xf32>
    %cst_3 = arith.constant 1.250000e-01 : f32
    %5 = vector.broadcast %cst_3 : f32 to vector<1x256xf32>
    %6 = arith.mulf %4, %5 : vector<1x256xf32>
    %7 = arith.mulf %6, %6 : vector<1x256xf32>
    %8 = vector.shape_cast %7 : vector<1x256xf32> to vector<1x1x256xf32>
    %cst_4 = arith.constant dense<0.000000e+00> : vector<1xf32>
    %9 = vector.multi_reduction <add>, %8, %cst_4 [1, 2] : vector<1x1x256xf32> to vector<1xf32>
    %10 = vector.shape_cast %9 : vector<1xf32> to vector<1x1x1xf32>
    %11 = vector.extract %10[0, 0, 0] : f32 from vector<1x1x1xf32>
    %c0_5 = arith.constant 0 : index
    %c0_6 = arith.constant 0 : index
    %12 = memref.load %arg3[%c0_5, %c0_6] : memref<1x1xf32, #tpu.memory_space<smem>>
    memref.store %11, %arg3[%c0_5, %c0_6] : memref<1x1xf32, #tpu.memory_space<smem>>
    return
  }
  func.func @transform_0(%arg0: i32) -> (i32, i32) {
    %c0_i32 = arith.constant 0 : i32
    %c0_i32_0 = arith.constant 0 : i32
    return %c0_i32, %arg0 : i32, i32
  }
  func.func @transform_1(%arg0: i32) -> (i32, i32) {
    %c0_i32 = arith.constant 0 : i32
    %c0_i32_0 = arith.constant 0 : i32
    return %c0_i32, %arg0 : i32, i32
  }
  func.func @transform_2(%arg0: i32) -> (i32, i32) {
    %c0_i32 = arith.constant 0 : i32
    %c0_i32_0 = arith.constant 0 : i32
    return %arg0, %c0_i32 : i32, i32
  }
}

</mosaic_0001>

<llo_original>
// kernel: tpu_custom_call.1
$region0: #{tpu_custom_call.1}
  #allocation0 [shape = 'u32[]', space=smem, size = 0x4, offset = 0x4, fixed_abs, tag = 'smem constant byte address 0x4 - core index']
  #allocation1 [shape = 'u32[144,128]{1,0:T(1,128)}', space=vmem, size = 0x12000, scoped, tag = 'internal scratch']
  %s0 = inlined_call_operand.hbm [shape: f32[8,256], index: 0, kind: input, shape index: {}]
  %s1 = inlined_call_operand.hbm [shape: f32[8,256], index: 1, kind: input, shape index: {}]
  %s2 = inlined_call_operand.hbm [shape: f32[1,1], index: 2, kind: output, shape index: {}]
  %s3 = sld [smem:[#allocation0]]
  $region26: #{tpu_custom_call.1} parent=0
    _
  %s5 = ssub.s32 1, %s3
  %s6 = scalar_select 0, %s5, %s3
  $region1: #{tpu_custom_call.1} parent=0
    #allocation2 [shape = 'u8[8192]{0}', space=vmem, size = 0x2000, scoped, tag = 'input window, operand 0, single buffered']
    #allocation3 [shape = 's32[1]{0}', space=sflag, size = 0x4, scoped, tag = 'scoped memory for tpu_custom_call.1']
    #allocation4 [shape = 's32[1]{0}', space=sflag, size = 0x4, scoped, tag = 'scoped memory for tpu_custom_call.1']
    #allocation5 [shape = 'u8[8192]{0}', space=vmem, size = 0x2000, scoped, tag = 'input window, operand 1, single buffered']
    #allocation6 [shape = 's32[1]{0}', space=sflag, size = 0x4, scoped, tag = 'scoped memory for tpu_custom_call.1']
    #allocation7 [shape = 'u8[512]{0}', space=smem, size = 0x200, scoped, tag = 'output window, operand 0, single buffered']
    %7 = vsyncpa [#allocation3], 0
    %8 = vsyncpa [#allocation6], 0
    %9 = vsyncpa [#allocation4], 0
    // Predicated region
    $region2: #{tpu_custom_call.1} parent=1 // pred_check
      _
    $region3: #{tpu_custom_call.1} parent=1 // pred_check_branch
      %11 = sbr.rel (0) target = $region5
    $region4: #{tpu_custom_call.1} parent=1 // pred_region
      %s13 = ssub.s32 256, 256
      %14 = vsyncadd [#allocation3], %s13
      %s16 = sshll.u32 [#allocation2], 4
      %s17 = int_to_ptr.vmem [resolvable:$true] %s16
      %19 = dma.hbm_to_vmem [thread:$0]  %s0, 256, %s17, [#allocation3]
    $region5: #{tpu_custom_call.1} parent=1 // pred_fallthru
      _
    // Predicated region
    $region6: #{tpu_custom_call.1} parent=1 // pred_check
      _
    $region7: #{tpu_custom_call.1} parent=1 // pred_check_branch
      %21 = sbr.rel (0) target = $region9
    $region8: #{tpu_custom_call.1} parent=1 // pred_region
      %s23 = ssub.s32 256, 256
      %24 = vsyncadd [#allocation6], %s23
      %s26 = sshll.u32 [#allocation5], 4
      %s27 = int_to_ptr.vmem [resolvable:$true] %s26
      %29 = dma.hbm_to_vmem [thread:$0]  %s1, 256, %s27, [#allocation6]
    $region9: #{tpu_custom_call.1} parent=1 // pred_fallthru
      _
    // Predicated region
    $region10: #{tpu_custom_call.1} parent=1 // pred_check
      _
    $region11: #{tpu_custom_call.1} parent=1 // pred_check_branch
      %31 = sbr.rel (0) target = $region13
    $region12: #{tpu_custom_call.1} parent=1 // pred_region
      %32 = dma.done [#allocation3], 256
    $region13: #{tpu_custom_call.1} parent=1 // pred_fallthru
      _
    // Predicated region
    $region14: #{tpu_custom_call.1} parent=1 // pred_check
      _
    $region15: #{tpu_custom_call.1} parent=1 // pred_check_branch
      %34 = sbr.rel (0) target = $region17
    $region16: #{tpu_custom_call.1} parent=1 // pred_region
      %35 = dma.done [#allocation6], 256
    $region17: #{tpu_custom_call.1} parent=1 // pred_fallthru
      _
    %v36 = vld [vmem:[#allocation2] sm:$0xff]
    %v37 = vld [vmem:[#allocation2 + $0x8] sm:$0xff]
    %v38 = vld [vmem:[#allocation5] sm:$0xff]
    %v39 = vld [vmem:[#allocation5 + $0x8] sm:$0xff]
    %v40 = vsub.f32 %v36, %v38
    %v41 = vsub.f32 %v37, %v39
    %v42 = vrot.slane %v40, 4
    %v43 = vadd.f32 %v40, %v42
    %v44 = vrot.slane %v43, 2
    %v45 = vadd.f32 %v43, %v44
    %v46 = vrot.slane %v45, 1
    %v47 = vadd.f32 %v45, %v46
    %v48 = vrot.slane %v41, 4
    %v49 = vadd.f32 %v41, %v48
    %v50 = vrot.slane %v49, 2
    %v51 = vadd.f32 %v49, %v50
    %v52 = vrot.slane %v51, 1
    %v53 = vadd.f32 %v51, %v52
    %v54 = vmul.f32 %v47, 0.125
    %v55 = vmul.f32 %v53, 0.125
    %v56 = vmul.f32 %v54, %v54
    %v57 = vmul.f32 %v55, %v55
    %vm58 = vcmask 1040384
    %v59 = vsel %vm58, %v56, 0.0
    %v60 = vsel %vm58, %v57, 0.0
    %v61 = vadd.f32 %v59, %v60
    %62 = vadd.xlane.f32.xlu0 %v61
    %v63 = vpop.xlane.xlu0 %62
    %v64 = vrot.slane %v63, 4
    %v65 = vadd.f32 %v63, %v64
    %v66 = vrot.slane %v65, 2
    %v67 = vadd.f32 %v65, %v66
    %v68 = vrot.slane %v67, 1
    %v69 = vadd.f32 %v67, %v68
    %s70 = vtos %v69
    %s71 = scalar_lea.smem [#allocation7], 0
    %72 = sst [smem:[%s71]] %s70
    // Predicated region
    $region18: #{tpu_custom_call.1} parent=1 // pred_check
      _
    $region19: #{tpu_custom_call.1} parent=1 // pred_check_branch
      %74 = sbr.rel (0) target = $region21
    $region20: #{tpu_custom_call.1} parent=1 // pred_region
      %s76 = ssub.s32 16, 16
      %77 = vsyncadd [#allocation4], %s76
      %80 = dma.smem_to_hbm [#allocation7], 16, %s2, [#allocation4]
    $region21: #{tpu_custom_call.1} parent=1 // pred_fallthru
      _
    // Predicated region
    $region22: #{tpu_custom_call.1} parent=1 // pred_check
      _
    $region23: #{tpu_custom_call.1} parent=1 // pred_check_branch
      %82 = sbr.rel (0) target = $region25
    $region24: #{tpu_custom_call.1} parent=1 // pred_region
      %83 = dma.done [#allocation4], 16
    $region25: #{tpu_custom_call.1} parent=1 // pred_fallthru
      _
    %84 = sfence
    %85 = vsyncpa [#allocation3], 1
    %86 = vsyncpa [#allocation6], 1
    %87 = vsyncpa [#allocation4], 1

</llo_original>
